<compile_context>
chip_gen: v6e
topology: v6e:2x2x1
jax: 0.10.0
libtpu: 0.0.40
codegen_flags: <defaults>
</compile_context>

<pallas_src>
import math

import jax
import jax.numpy as jnp
import numpy as np
from jax import lax
from jax.experimental import pallas as pl
from jax.experimental.pallas import tpu as pltpu

_MIB = 1024 * 1024


# ---------------------------------------------------------------------------
# Chip-aware parameters / VMEM budgeting.
# ---------------------------------------------------------------------------
def _tpu_params():
    """Returns (vmem_capacity_bytes, mxu_width, num_tensorcores)."""
    vmem = None
    try:  # hardware query; fall back to device_kind parsing if unavailable
        info = pltpu.get_tpu_info()
        vmem = getattr(info, "vmem_capacity_bytes", None)
    except Exception:
        vmem = None
    kind = ""
    try:
        kind = jax.devices()[0].device_kind.lower()
    except Exception:
        pass
    if "v7" in kind:      # v7x: 64 MiB VMEM / TC, 256-wide MXU, 2 TCs per chip
        return (vmem or 64 * _MIB), 256, 2
    if "v6" in kind:      # v6e: 128 MiB VMEM, 256-wide MXU, 1 TC
        return (vmem or 128 * _MIB), 256, 1
    # v5e / v5p / unknown: conservative (128 MiB VMEM, 128-wide MXU, 1 TC)
    return (vmem or 128 * _MIB), 128, 1


def _attn_vmem_bytes(c, cout, tq, tkv, cd_bytes, flash):
    """Generous VMEM estimate for kernel 1 (double-buffered tiles + temps)."""
    b = 0
    b += 2 * c * tq * cd_bytes             # q tile (double-buffered)
    b += 2 * c * tkv * cd_bytes            # k/v tile (double-buffered)
    b += 2 * 2 * cout * 2 * c * cd_bytes   # conv weights (generous)
    b += 2 * cout * tq * 4                 # z output tile (<= f32)
    b += 4 * cout * 128 * 4                # zsum / z2sum lane-padded blocks
    if flash:
        b += (2 * tq + c * tq) * 4         # m / l / acc scratch
    b += 2 * tkv * tq * 4                  # s and p f32 temporaries
    b += (2 * c + 2 * cout) * tq * 4       # x_j / att / z temporaries
    return int(b * 1.2) + 2 * _MIB


def _vmem_limit(estimate, cap):
    """Scoped-VMEM request: 2x real need, never above 75% of physical VMEM."""
    return int(min(0.75 * cap, max(32 * _MIB, 2 * estimate)))


def _pick_attn_tiles(n, c, cout, cd_bytes, vmem_cap, mxu, batch, n_cores,
                     force_flash):
    """Pick (tq, tkv, single_kv) for the attention kernel."""
    budget = int(0.45 * vmem_cap)
    if n % 128 != 0:
        # Lane axis cannot be tiled (block last dim must be 128-aligned or
        # equal to the full dim): use the full row.
        # TODO(synk): pad N to a multiple of 128 for large, odd spatial sizes.
        return n, n, True
    # Query tile: fill the 256-wide MXU on v6e/v7x (128 on v5e); keep at least
    # max(2, n_cores) parallel (batch, q-tile) steps so both v7x cores work.
    pref = (256, 128) if mxu >= 256 else (128, 256)
    cands = [t for t in pref if n % t == 0] or [n]
    tq = cands[0]
    for t in cands:
        if batch * (n // t) >= max(2, n_cores):
            tq = t
            break
    # K/V-resident single pass: whole (C, N) slab + (N, tq) score temp fit.
    if not force_flash and _attn_vmem_bytes(c, cout, tq, n, cd_bytes,
                                            flash=False) <= budget:
        return tq, n, True
    # Flash fallback: biggest kv tile that fits and leaves >= 2 pipeline steps.
    tkv = 128
    for cand in (1024, 512, 256, 128):
        if n % cand == 0 and n // cand >= 2 and \
                _attn_vmem_bytes(c, cout, tq, cand, cd_bytes,
                                 flash=True) <= budget:
            tkv = cand
            break
    return tq, tkv, False


def _pick_ew_tile(n, vmem_cap):
    # tn=1024 already sits at ~86% of the HBM roofline; prefer it on v7x
    # (64 MiB VMEM), allow 2048 where VMEM is plentiful.
    cands = (1024, 512, 256, 128) if vmem_cap <= 64 * _MIB \
        else (2048, 1024, 512, 256, 128)
    for cand in cands:
        if n % cand == 0:
            return cand
    return n


# ---------------------------------------------------------------------------
# Kernel 1: self-attention + max-relative + split/fused 1x1 conv, fused with
# per-tile BatchNorm partial sums (pass A of the 2-pass BN).
# Layout: x as (B, C, N) so N sits on the 128-wide lane axis.
# ---------------------------------------------------------------------------
def _make_attn_maxrel_conv_kernel(n_w, single_kv, cd):
    """n_w==1: one (Cout,2C) weight + sublane concat (requires C % 8 == 0);
    n_w==2: two (Cout,C) weights, sum of two matmuls (any C).
    single_kv: whole K/V row resident per batch, plain softmax, no scratch;
    otherwise flash-style online softmax over kv tiles with scratch accums."""

    def _conv1x1(w_refs, x_cd, xj_cd):
        if n_w == 1:
            # One MXU pass over K=2C instead of two passes with K=C each.
            feat = jnp.concatenate([x_cd, xj_cd], axis=0)             # (2C, TQ)
            return jnp.dot(w_refs[0][...], feat,
                           preferred_element_type=jnp.float32)
        return (jnp.dot(w_refs[0][...], x_cd, preferred_element_type=jnp.float32)
                + jnp.dot(w_refs[1][...], xj_cd,
                          preferred_element_type=jnp.float32))

    def _finalize(att, q, w_refs, z_ref, zsum_ref, z2sum_ref):
        x_f32 = q.astype(jnp.float32)
        x_j = jnp.maximum(x_f32 - att, 0.0)            # max-relative feature
        # Conv bias omitted: it cancels exactly under training-mode BatchNorm.
        z = _conv1x1(w_refs, q, x_j.astype(cd))                       # (Cout, TQ)
        z_ref[0] = z.astype(z_ref.dtype)
        # BN pass A: per-(batch, q-tile) channel sums / sums of squares (f32,
        # taken from the f32 z before the bf16 store).
        zsum_ref[0, 0] = jnp.sum(z, axis=1, keepdims=True)
        z2sum_ref[0, 0] = jnp.sum(z * z, axis=1, keepdims=True)

    if single_kv:
        def kernel(*refs):
            xq_ref, xkv_ref = refs[0], refs[1]
            w_refs = refs[2:2 + n_w]
            z_ref, zsum_ref, z2sum_ref = refs[2 + n_w:5 + n_w]
            q = xq_ref[0]                              # (C, TQ)  compute dtype
            k = xkv_ref[0]                             # (C, N)   compute dtype
            # scores^T[kv, q] = sum_c k[c,kv] * q[c,q] (bf16 operands, f32 acc;
            # contraction on dim 0 of both -> MXU transposed-LHS path, no
            # per-step XLU transpose of the kv tile).
            s = lax.dot_general(k, q, (((0,), (0,)), ((), ())),
                                preferred_element_type=jnp.float32)   # (N, TQ)
            s = s - jnp.max(s, axis=0, keepdims=True)
            p = jnp.exp(s)
            denom = jnp.sum(p, axis=0, keepdims=True)                 # (1, TQ)
            att = jnp.dot(k, p.astype(cd), preferred_element_type=jnp.float32)
            att = att * pl.reciprocal(denom, approx=True)             # (C, TQ)
            _finalize(att, q, w_refs, z_ref, zsum_ref, z2sum_ref)
        return kernel

    def kernel(*refs):
        xq_ref, xkv_ref = refs[0], refs[1]
        w_refs = refs[2:2 + n_w]
        z_ref, zsum_ref, z2sum_ref = refs[2 + n_w:5 + n_w]
        m_sc, l_sc, acc_sc = refs[5 + n_w:8 + n_w]
        ki = pl.program_id(2)

        @pl.when(ki == 0)
        def _init():
            m_sc[...] = jnp.full(m_sc.shape, -jnp.inf, jnp.float32)
            l_sc[...] = jnp.zeros(l_sc.shape, jnp.float32)
            acc_sc[...] = jnp.zeros(acc_sc.shape, jnp.float32)

        q = xq_ref[0]                                  # (C, TQ)
        k = xkv_ref[0]                                 # (C, TKV)
        s = lax.dot_general(k, q, (((0,), (0,)), ((), ())),
                            preferred_element_type=jnp.float32)       # (TKV, TQ)
        # Online softmax over the kv (sublane) axis.
        m_blk = jnp.max(s, axis=0, keepdims=True)
        m_new = jnp.maximum(m_sc[...], m_blk)
        alpha = jnp.exp(m_sc[...] - m_new)
        # NOTE: if a bundle dump shows the single EUP port binding on this exp,
        # a bf16 exp (v6e/v7x only) is the next lever; kept in f32 here.
        p = jnp.exp(s - m_new)
        l_sc[...] = alpha * l_sc[...] + jnp.sum(p, axis=0, keepdims=True)
        acc_sc[...] = alpha * acc_sc[...] + jnp.dot(
            k, p.astype(cd), preferred_element_type=jnp.float32)
        m_sc[...] = m_new

        @pl.when(ki == pl.num_programs(2) - 1)
        def _fin():
            att = acc_sc[...] * pl.reciprocal(l_sc[...], approx=True)
            _finalize(att, q, w_refs, z_ref, zsum_ref, z2sum_ref)

    return kernel


# ---------------------------------------------------------------------------
# Kernel 2 (BN pass B): per-channel affine (folded gamma/beta/mean/var)
# followed by exact (erf) GELU. Pure elementwise, pipelined, lane-dense.
# ---------------------------------------------------------------------------
def _bn_gelu_kernel(z_ref, scale_ref, shift_ref, o_ref):
    z = z_ref[...].astype(jnp.float32)                 # (1, Cout, TN)
    y = z * scale_ref[...] + shift_ref[...]            # broadcast along lanes
    o_ref[...] = jax.nn.gelu(y, approximate=False).astype(o_ref.dtype)


# ---------------------------------------------------------------------------
# Wrapper.
# ---------------------------------------------------------------------------
def mrconv4d_tf(x_nchw, w, b, gamma, beta, *, eps=1e-5,
                compute_dtype=jnp.bfloat16, force_flash=False):
    """MRConv4dTF forward.

    x_nchw: (B, C, H, W); w: (2C, Cout) (torch Conv2d weight (Cout, 2C, 1, 1)
    squeezed + transposed); b/gamma/beta: (Cout,). Returns (B, Cout, H, W).

    compute_dtype (default bf16) feeds the QK^T / PV / conv matmul operands;
    accumulation, softmax and BatchNorm statistics always stay in f32.
    """
    B, C, H, W = x_nchw.shape
    N = H * W
    Cout = w.shape[1]
    cd = jnp.dtype(compute_dtype)
    cd_bytes = cd.itemsize
    vmem_cap, mxu, n_cores = _tpu_params()

    # NCHW -> (B, C, N): pure reshape, N lands on the 128-wide lane axis.
    x_cn = x_nchw.reshape(B, C, N).astype(cd)

    # 1x1 conv on concat([x, x_j], ch): single (Cout, 2C) matmul when the
    # in-kernel sublane concat is aligned (C % 8 == 0), otherwise two matmuls.
    if C % 8 == 0:
        w_list = [jnp.transpose(w).astype(cd)]               # (Cout, 2C)
    else:
        w_list = [jnp.transpose(w[:C]).astype(cd),           # (Cout, C)
                  jnp.transpose(w[C:]).astype(cd)]           # (Cout, C)
    n_w = len(w_list)
    del b  # conv bias cancels exactly under the training-mode BatchNorm below

    tq, tkv, single_kv = _pick_attn_tiles(N, C, Cout, cd_bytes, vmem_cap, mxu,
                                          B, n_cores, force_flash)
    nq = N // tq
    # Intermediate z stored in bf16 (written once / read once) when the
    # compute path is bf16; f32 is preserved for the exact-math override.
    z_dtype = jnp.bfloat16 if cd_bytes <= 2 else jnp.float32

    kernel = _make_attn_maxrel_conv_kernel(n_w, single_kv, cd)

    if single_kv:
        grid = (B, nq)
        in_specs = [pl.BlockSpec((1, C, tq), lambda b_, qi: (b_, 0, qi)),
                    pl.BlockSpec((1, C, N), lambda b_, qi: (b_, 0, 0))]
        in_specs += [pl.BlockSpec(wl.shape, lambda b_, qi: (0, 0))
                     for wl in w_list]
        out_specs = [
            pl.BlockSpec((1, Cout, tq), lambda b_, qi: (b_, 0, qi)),
            pl.BlockSpec((1, 1, Cout, 1), lambda b_, qi: (b_, qi, 0, 0)),
            pl.BlockSpec((1, 1, Cout, 1), lambda b_, qi: (b_, qi, 0, 0)),
        ]
        scratch = []
        dims = ("parallel", "parallel")
    else:
        nkv = N // tkv
        grid = (B, nq, nkv)
        in_specs = [pl.BlockSpec((1, C, tq), lambda b_, qi, ki: (b_, 0, qi)),
                    pl.BlockSpec((1, C, tkv), lambda b_, qi, ki: (b_, 0, ki))]
        in_specs += [pl.BlockSpec(wl.shape, lambda b_, qi, ki: (0, 0))
                     for wl in w_list]
        out_specs = [
            pl.BlockSpec((1, Cout, tq), lambda b_, qi, ki: (b_, 0, qi)),
            pl.BlockSpec((1, 1, Cout, 1), lambda b_, qi, ki: (b_, qi, 0, 0)),
            pl.BlockSpec((1, 1, Cout, 1), lambda b_, qi, ki: (b_, qi, 0, 0)),
        ]
        scratch = [pltpu.VMEM((1, tq), jnp.float32),    # running max
                   pltpu.VMEM((1, tq), jnp.float32),    # running sum
                   pltpu.VMEM((C, tq), jnp.float32)]    # PV accumulator
        dims = ("parallel", "parallel", "arbitrary")

    est1 = _attn_vmem_bytes(C, Cout, tq, tkv, cd_bytes, flash=not single_kv)
    z, zsum, z2sum = pl.pallas_call(
        kernel,
        out_shape=(
            jax.ShapeDtypeStruct((B, Cout, N), z_dtype),
            jax.ShapeDtypeStruct((B, nq, Cout, 1), jnp.float32),
            jax.ShapeDtypeStruct((B, nq, Cout, 1), jnp.float32),
        ),
        grid_spec=pltpu.PrefetchScalarGridSpec(
            num_scalar_prefetch=0,
            grid=grid,
            in_specs=in_specs,
            out_specs=out_specs,
            scratch_shapes=scratch,
        ),
        compiler_params=pltpu.CompilerParams(
            dimension_semantics=dims,
            vmem_limit_bytes=_vmem_limit(est1, vmem_cap),
        ),
    )(x_cn, x_cn, *w_list)

    # Finish BN pass A in plain JAX (a few Cout-sized reductions); fold
    # gamma/beta/mean/var into one per-channel scale + shift.
    count = float(B * N)
    s1 = jnp.sum(zsum, axis=(0, 1))[:, 0]
    s2 = jnp.sum(z2sum, axis=(0, 1))[:, 0]
    mean = s1 / count
    # Biased variance via E[z^2] - mean^2 (f32 sums). TODO(synk): use a
    # shifted/compensated accumulation if per-channel |mean| >> std.
    var = jnp.maximum(s2 / count - mean * mean, 0.0)
    scale = gamma * lax.rsqrt(var + eps)
    shift = beta - mean * scale
    # TODO(synk): BatchNorm running_mean/var tracking (stateful training-side
    # bookkeeping) is not produced; forward output uses batch stats only.

    tn = _pick_ew_tile(N, vmem_cap)
    out_bytes = jnp.dtype(x_nchw.dtype).itemsize
    est2 = int(2 * Cout * tn * (jnp.dtype(z_dtype).itemsize + out_bytes) * 1.2) \
        + 4 * Cout * 128 * 4 + _MIB
    y = pl.pallas_call(
        _bn_gelu_kernel,
        out_shape=jax.ShapeDtypeStruct((B, Cout, N), x_nchw.dtype),
        grid=(B, N // tn),
        in_specs=[
            pl.BlockSpec((1, Cout, tn), lambda b_, ti: (b_, 0, ti)),
            pl.BlockSpec((1, Cout, 1), lambda b_, ti: (0, 0, 0)),
            pl.BlockSpec((1, Cout, 1), lambda b_, ti: (0, 0, 0)),
        ],
        out_specs=pl.BlockSpec((1, Cout, tn), lambda b_, ti: (b_, 0, ti)),
        compiler_params=pltpu.CompilerParams(
            dimension_semantics=("parallel", "parallel"),
            vmem_limit_bytes=_vmem_limit(est2, vmem_cap),
        ),
    )(z, scale.reshape(1, Cout, 1).astype(jnp.float32),
      shift.reshape(1, Cout, 1).astype(jnp.float32))

    # (B, Cout, N) -> NCHW is a pure reshape.
    return y.reshape(B, Cout, H, W)


def _reference(x, w, b, gamma, beta, eps=1e-5):
    """Pure-JAX forward identical to the PyTorch module (training-mode BN)."""
    B, C, H, W = x.shape
    N = H * W
    hp = lax.Precision.HIGHEST
    q = jnp.transpose(x.reshape(B, C, N), (0, 2, 1))                  # (B, N, C)
    att = jnp.matmul(q, jnp.transpose(q, (0, 2, 1)), precision=hp)
    att = jax.nn.softmax(att, axis=-1)
    att = jnp.matmul(att, q, precision=hp)                            # (B, N, C)
    att = jnp.transpose(att, (0, 2, 1)).reshape(B, C, H, W)
    x_j = jnp.maximum(x - att, 0.0)
    feat = jnp.concatenate([x, x_j], axis=1).reshape(B, 2 * C, N)     # (B, 2C, N)
    z = jnp.einsum("bkn,ko->bon", feat, w, precision=hp) + b[None, :, None]
    mean = jnp.mean(z, axis=(0, 2), keepdims=True)
    var = jnp.mean((z - mean) ** 2, axis=(0, 2), keepdims=True)
    zh = (z - mean) * lax.rsqrt(var + eps) * gamma[None, :, None] + beta[None, :, None]
    return jax.nn.gelu(zh, approximate=False).reshape(B, -1, H, W)


if __name__ == "__main__":
    B, C, H, W = 2, 4, 16, 16
    Cout = 2 * C  # BatchNorm2d(2*C) after the conv forces out_channels == 2*C

    key = jax.random.PRNGKey(0)
    kx, kw, kb = jax.random.split(key, 3)
    x = jax.random.normal(kx, (B, C, H, W), dtype=jnp.float32)

    # Conv2d(2C, Cout, 1) params, PyTorch default init; stored as (2C, Cout)
    # (= torch weight (Cout, 2C, 1, 1) squeezed + transposed).
    fan_in = 2 * C
    bound = 1.0 / math.sqrt(fan_in)
    w = jax.random.uniform(kw, (2 * C, Cout), minval=-bound, maxval=bound,
                           dtype=jnp.float32)
    bias = jax.random.uniform(kb, (Cout,), minval=-bound, maxval=bound,
                              dtype=jnp.float32)
    gamma = jnp.ones((Cout,), jnp.float32)
    beta = jnp.zeros((Cout,), jnp.float32)

    ref = jax.block_until_ready(_reference(x, w, bias, gamma, beta))

    # Tight correctness check with f32 matmul operands (exact-math config),
    # covering both the resident-KV single pass and the flash fallback.
    out_f32 = jax.block_until_ready(
        mrconv4d_tf(x, w, bias, gamma, beta, compute_dtype=jnp.float32))
    np.testing.assert_allclose(np.asarray(out_f32), np.asarray(ref),
                               rtol=5e-2, atol=5e-2)
    out_f32_flash = jax.block_until_ready(
        mrconv4d_tf(x, w, bias, gamma, beta, compute_dtype=jnp.float32,
                    force_flash=True))
    np.testing.assert_allclose(np.asarray(out_f32_flash), np.asarray(ref),
                               rtol=5e-2, atol=5e-2)

    # Default performance path: bf16 matmul operands (f32 accumulate) + bf16
    # intermediate z. Looser tolerance absorbs bf16 rounding of x / softmax
    # weights; semantic/layout correctness is already pinned by the f32 checks.
    out = jax.block_until_ready(mrconv4d_tf(x, w, bias, gamma, beta))
    assert out.shape == (B, Cout, H, W), out.shape
    np.testing.assert_allclose(np.asarray(out), np.asarray(ref),
                               rtol=2e-1, atol=2e-1)

    print("KERNEL_OK")
</pallas_src>

<mosaic_0001>
module attributes {stable_mosaic.version = 11 : i64} {
  func.func @kernel(%arg0: i32, %arg1: i32, %arg2: memref<1x4x128xf32, #tpu.memory_space<vmem>>, %arg3: memref<1x4x256xf32, #tpu.memory_space<vmem>>, %arg4: memref<8x4xf32, #tpu.memory_space<vmem>>, %arg5: memref<8x4xf32, #tpu.memory_space<vmem>>, %arg6: memref<1x8x128xf32, #tpu.memory_space<vmem>>, %arg7: memref<1x1x8x1xf32, #tpu.memory_space<vmem>>, %arg8: memref<1x1x8x1xf32, #tpu.memory_space<vmem>>) attributes {dimension_semantics = [#tpu.dimension_semantics<parallel>, #tpu.dimension_semantics<parallel>], iteration_bounds = array<i64: 2, 2>, scalar_prefetch = 0 : i64, scratch_operands = 0 : i64, tpu.core_type = #tpu.core_type<tc>, window_params = [{transform_indices = @transform_0, window_bounds = array<i64: 1, 4, 128>}, {transform_indices = @transform_1, window_bounds = array<i64: 1, 4, 256>}, {pipeline_mode = #tpu.pipeline_mode<synchronous>, transform_indices = @transform_2, window_bounds = array<i64: 8, 4>}, {pipeline_mode = #tpu.pipeline_mode<synchronous>, transform_indices = @transform_3, window_bounds = array<i64: 8, 4>}, {transform_indices = @transform_4, window_bounds = array<i64: 1, 8, 128>}, {transform_indices = @transform_5, window_bounds = array<i64: 1, 1, 8, 1>}, {transform_indices = @transform_6, window_bounds = array<i64: 1, 1, 8, 1>}]} {
    %c0 = arith.constant 0 : index
    %c0_0 = arith.constant 0 : index
    %c0_1 = arith.constant 0 : index
    %0 = vector.load %arg2[%c0, %c0_0, %c0_1] : memref<1x4x128xf32, #tpu.memory_space<vmem>>, vector<1x4x128xf32>
    %1 = vector.shape_cast %0 : vector<1x4x128xf32> to vector<4x128xf32>
    %c0_2 = arith.constant 0 : index
    %c0_3 = arith.constant 0 : index
    %c0_4 = arith.constant 0 : index
    %2 = vector.load %arg3[%c0_2, %c0_3, %c0_4] : memref<1x4x256xf32, #tpu.memory_space<vmem>>, vector<1x4x256xf32>
    %3 = vector.shape_cast %2 : vector<1x4x256xf32> to vector<4x256xf32>
    %cst = arith.constant dense<0.000000e+00> : vector<256x128xf32>
    %4 = tpu.matmul %3, %1, %cst {dimension_numbers = #tpu.dot_dimension_numbers<[0], [0], [1], [1], [0, 1, 1, 1], [], []>} : vector<4x256xf32>, vector<4x128xf32>, vector<256x128xf32> -> vector<256x128xf32>
    %cst_5 = arith.constant dense<0xFF800000> : vector<128xf32>
    %5 = vector.multi_reduction <maximumf>, %4, %cst_5 [0] : vector<256x128xf32> to vector<128xf32>
    %6 = vector.shape_cast %5 : vector<128xf32> to vector<1x128xf32>
    %7 = vector.broadcast %6 : vector<1x128xf32> to vector<256x128xf32>
    %8 = arith.subf %4, %7 : vector<256x128xf32>
    %9 = math.exp %8 : vector<256x128xf32>
    %cst_6 = arith.constant dense<0.000000e+00> : vector<128xf32>
    %10 = vector.multi_reduction <add>, %9, %cst_6 [0] : vector<256x128xf32> to vector<128xf32>
    %11 = vector.shape_cast %10 : vector<128xf32> to vector<1x128xf32>
    %cst_7 = arith.constant dense<0.000000e+00> : vector<4x128xf32>
    %12 = tpu.matmul %3, %9, %cst_7 {dimension_numbers = #tpu.dot_dimension_numbers<[1], [0], [0], [1], [0, 0, 1, 1], [], []>} : vector<4x256xf32>, vector<256x128xf32>, vector<4x128xf32> -> vector<4x128xf32>
    %13 = tpu.reciprocal %11 {approx = true} : vector<1x128xf32> -> vector<1x128xf32>
    %14 = vector.broadcast %13 : vector<1x128xf32> to vector<4x128xf32>
    %15 = arith.mulf %12, %14 : vector<4x128xf32>
    %16 = arith.subf %1, %15 : vector<4x128xf32>
    %cst_8 = arith.constant 0.000000e+00 : f32
    %17 = vector.broadcast %cst_8 : f32 to vector<4x128xf32>
    %18 = arith.maximumf %16, %17 : vector<4x128xf32>
    %c0_9 = arith.constant 0 : index
    %c0_10 = arith.constant 0 : index
    %19 = vector.load %arg4[%c0_9, %c0_10] : memref<8x4xf32, #tpu.memory_space<vmem>>, vector<8x4xf32>
    %cst_11 = arith.constant dense<0.000000e+00> : vector<8x128xf32>
    %20 = tpu.matmul %19, %1, %cst_11 {dimension_numbers = #tpu.dot_dimension_numbers<[1], [0], [0], [1], [0, 0, 1, 1], [], []>} : vector<8x4xf32>, vector<4x128xf32>, vector<8x128xf32> -> vector<8x128xf32>
    %c0_12 = arith.constant 0 : index
    %c0_13 = arith.constant 0 : index
    %21 = vector.load %arg5[%c0_12, %c0_13] : memref<8x4xf32, #tpu.memory_space<vmem>>, vector<8x4xf32>
    %cst_14 = arith.constant dense<0.000000e+00> : vector<8x128xf32>
    %22 = tpu.matmul %21, %18, %cst_14 {dimension_numbers = #tpu.dot_dimension_numbers<[1], [0], [0], [1], [0, 0, 1, 1], [], []>} : vector<8x4xf32>, vector<4x128xf32>, vector<8x128xf32> -> vector<8x128xf32>
    %23 = arith.addf %20, %22 : vector<8x128xf32>
    %c0_15 = arith.constant 0 : index
    %c0_16 = arith.constant 0 : index
    %c0_17 = arith.constant 0 : index
    %24 = vector.load %arg6[%c0_15, %c0_16, %c0_17] : memref<1x8x128xf32, #tpu.memory_space<vmem>>, vector<1x8x128xf32>
    %25 = vector.shape_cast %24 : vector<1x8x128xf32> to vector<8x128xf32>
    %26 = vector.shape_cast %23 : vector<8x128xf32> to vector<1x8x128xf32>
    tpu.vector_store %arg6[%c0_15, %c0_16, %c0_17], %26 {strides = array<i32>} : memref<1x8x128xf32, #tpu.memory_space<vmem>>, vector<1x8x128xf32>,
    %cst_18 = arith.constant dense<0.000000e+00> : vector<8xf32>
    %27 = vector.multi_reduction <add>, %23, %cst_18 [1] : vector<8x128xf32> to vector<8xf32>
    %28 = vector.shape_cast %27 : vector<8xf32> to vector<8x1xf32>
    %c0_19 = arith.constant 0 : index
    %c0_20 = arith.constant 0 : index
    %c0_21 = arith.constant 0 : index
    %c0_22 = arith.constant 0 : index
    %29 = vector.load %arg7[%c0_19, %c0_20, %c0_21, %c0_22] : memref<1x1x8x1xf32, #tpu.memory_space<vmem>>, vector<1x1x8x1xf32>
    %30 = vector.shape_cast %29 : vector<1x1x8x1xf32> to vector<8x1xf32>
    %31 = vector.shape_cast %28 : vector<8x1xf32> to vector<1x1x8x1xf32>
    tpu.vector_store %arg7[%c0_19, %c0_20, %c0_21, %c0_22], %31 {strides = array<i32>} : memref<1x1x8x1xf32, #tpu.memory_space<vmem>>, vector<1x1x8x1xf32>,
    %32 = arith.mulf %23, %23 : vector<8x128xf32>
    %cst_23 = arith.constant dense<0.000000e+00> : vector<8xf32>
    %33 = vector.multi_reduction <add>, %32, %cst_23 [1] : vector<8x128xf32> to vector<8xf32>
    %34 = vector.shape_cast %33 : vector<8xf32> to vector<8x1xf32>
    %c0_24 = arith.constant 0 : index
    %c0_25 = arith.constant 0 : index
    %c0_26 = arith.constant 0 : index
    %c0_27 = arith.constant 0 : index
    %35 = vector.load %arg8[%c0_24, %c0_25, %c0_26, %c0_27] : memref<1x1x8x1xf32, #tpu.memory_space<vmem>>, vector<1x1x8x1xf32>
    %36 = vector.shape_cast %35 : vector<1x1x8x1xf32> to vector<8x1xf32>
    %37 = vector.shape_cast %34 : vector<8x1xf32> to vector<1x1x8x1xf32>
    tpu.vector_store %arg8[%c0_24, %c0_25, %c0_26, %c0_27], %37 {strides = array<i32>} : memref<1x1x8x1xf32, #tpu.memory_space<vmem>>, vector<1x1x8x1xf32>,
    return
  }
  func.func @transform_0(%arg0: i32, %arg1: i32) -> (i32, i32, i32) {
    %c0_i32 = arith.constant 0 : i32
    %c0_i32_0 = arith.constant 0 : i32
    return %arg0, %c0_i32, %arg1 : i32, i32, i32
  }
  func.func @transform_1(%arg0: i32, %arg1: i32) -> (i32, i32, i32) {
    %c0_i32 = arith.constant 0 : i32
    %c0_i32_0 = arith.constant 0 : i32
    %c0_i32_1 = arith.constant 0 : i32
    return %arg0, %c0_i32, %c0_i32_0 : i32, i32, i32
  }
  func.func @transform_2(%arg0: i32, %arg1: i32) -> (i32, i32) {
    %c0_i32 = arith.constant 0 : i32
    %c0_i32_0 = arith.constant 0 : i32
    %c0_i32_1 = arith.constant 0 : i32
    return %c0_i32, %c0_i32_0 : i32, i32
  }
  func.func @transform_3(%arg0: i32, %arg1: i32) -> (i32, i32) {
    %c0_i32 = arith.constant 0 : i32
    %c0_i32_0 = arith.constant 0 : i32
    %c0_i32_1 = arith.constant 0 : i32
    return %c0_i32, %c0_i32_0 : i32, i32
  }
  func.func @transform_4(%arg0: i32, %arg1: i32) -> (i32, i32, i32) {
    %c0_i32 = arith.constant 0 : i32
    %c0_i32_0 = arith.constant 0 : i32
    return %arg0, %c0_i32, %arg1 : i32, i32, i32
  }
  func.func @transform_5(%arg0: i32, %arg1: i32) -> (i32, i32, i32, i32) {
    %c0_i32 = arith.constant 0 : i32
    %c0_i32_0 = arith.constant 0 : i32
    %c0_i32_1 = arith.constant 0 : i32
    return %arg0, %arg1, %c0_i32, %c0_i32_0 : i32, i32, i32, i32
  }
  func.func @transform_6(%arg0: i32, %arg1: i32) -> (i32, i32, i32, i32) {
    %c0_i32 = arith.constant 0 : i32
    %c0_i32_0 = arith.constant 0 : i32
    %c0_i32_1 = arith.constant 0 : i32
    return %arg0, %arg1, %c0_i32, %c0_i32_0 : i32, i32, i32, i32
  }
}

</mosaic_0001>

<llo_original>
// kernel: tpu_custom_call.1
$region0: #{tpu_custom_call.1}
  #allocation0 [shape = 'u32[]', space=smem, size = 0x4, offset = 0x4, fixed_abs, tag = 'smem constant byte address 0x4 - core index']
  #allocation1 [shape = 'u32[144,128]{1,0:T(1,128)}', space=vmem, size = 0x12000, scoped, tag = 'internal scratch']
  %s0 = inlined_call_operand.vmem [shape: f32[2,4,256], index: 0, kind: input, shape index: {}]
  %s1 = inlined_call_operand.hbm [shape: f32[2,4,256], index: 1, kind: input, shape index: {}]
  %s2 = inlined_call_operand.vmem [shape: f32[8,4], index: 2, kind: input, shape index: {}]
  %s3 = inlined_call_operand.vmem [shape: f32[8,4], index: 3, kind: input, shape index: {}]
  %s4 = inlined_call_operand.hbm [shape: f32[2,8,256], index: 4, kind: output, shape index: {0}]
  %s5 = inlined_call_operand.vmem [shape: f32[2,2,8,1], index: 5, kind: output, shape index: {1}]
  %s6 = inlined_call_operand.vmem [shape: f32[2,2,8,1], index: 6, kind: output, shape index: {2}]
  %7 = xla_tuple %s4, %s5, %s6
  %s8 = sld [smem:[#allocation0]]
  $region69: #{tpu_custom_call.1} parent=0
    _
  %s10 = ssub.s32 1, %s8
  %s11 = scalar_select 0, %s10, %s8
  $region1: #{tpu_custom_call.1} parent=0
    #allocation2 [shape = 'u8[8192]{0}', space=vmem, size = 0x2000, scoped, tag = 'input window, operand 1']
    #allocation3 [shape = 's32[2]{0}', space=sflag, size = 0x8, scoped, tag = 'scoped memory for tpu_custom_call.1']
    #allocation4 [shape = 's32[2]{0}', space=sflag, size = 0x8, scoped, tag = 'scoped memory for tpu_custom_call.1']
    #allocation5 [shape = 'u8[8192]{0}', space=vmem, size = 0x2000, scoped, tag = 'output window, operand 0']
    %12 = vsyncpa [#allocation3], 0
    %s13 = scalar_lea.sflag [#allocation3], 1
    %14 = vsyncpa %s13, 0
    %15 = vsyncpa [#allocation4], 0
    %s16 = scalar_lea.sflag [#allocation4], 1
    %17 = vsyncpa %s16, 0
    loop: start=0, step=1, limit=6
    $region2: #{tpu_custom_call.1} parent=1 // loop_pre_header
      _
    $region3: #{tpu_custom_call.1} parent=1 // loop_header
      %s19 = sphi 0, %s23
      %p20 = scmp.ge.s32.totalorder %s19, 6
      %s26 = sphi 0, %s38
      %s27 = sphi 0, %s34
      %s28 = sphi 0, %s26
      %s29 = sphi 0, %s27
      %s30 = sphi 0, %s28
      %s31 = sphi 0, %s29
      %s43 = sphi 0, %s45
      %s46 = sphi 0, %s43
      %s47 = sphi 0, %s46
      %s63 = sphi 0, %s47
      %s69 = sphi 0, %s71
      %s72 = sphi 0, %s69
      %s73 = sphi 0, %s72
      %s89 = sphi 0, %s73
      %s93 = sphi 0, %s93
      %s95 = sphi 0, %s93
      %s96 = sphi 0, %s95
      %s110 = sphi 0, %s96
      %s114 = sphi 0, %s114
      %s116 = sphi 0, %s114
      %s117 = sphi 0, %s116
      %s131 = sphi 0, %s117
      %s139 = sphi 0, %s141
      %s142 = sphi 0, %s139
      %s143 = sphi 0, %s142
      %s159 = sphi 0, %s143
      %s167 = sphi 0, %s169
      %s170 = sphi 0, %s167
      %s171 = sphi 0, %s170
      %s187 = sphi 0, %s171
      %s195 = sphi 0, %s197
      %s198 = sphi 0, %s195
      %s199 = sphi 0, %s198
      %s215 = sphi 0, %s199
    $region4: #{tpu_custom_call.1} parent=1 // loop_header_branch
      %22 = sbr.rel (%p20) target = $region8
    $region5: #{tpu_custom_call.1} parent=1 // loop_body
      %s24 = ssub.s32 %s19, 1
      %s25 = ssub.s32 %s19, 2
      %s32 = sadd.s32 1, %s27
      %p33 = scmp.ge.s32.totalorder %s32, 2
      %s34 = scalar_select %p33, 0, %s32
      %s35 = sadd.s32 1, %s26
      %s36 = scalar_select %p33, %s35, %s26
      %p37 = scmp.ge.s32.totalorder %s36, 2
      %s38 = scalar_select %p37, 0, %s36
      %s39 = ssub.s32 %s26, %s38
      %s40 = ssub.s32 %s27, %s34
      %s41 = sor.u32 %s39, %s40
      %p42 = scmp.eq.s32.totalorder %s41, 0
      %s44 = sadd.s32 %s43, 1
      %s45 = scalar_select %p42, %s43, %s44
      %p48 = pneg %p42
      %p49 = scmp.eq.s32.totalorder %s19, 3
      %p50 = por %p48, %p49
      %p51 = scmp.ne.s32.totalorder %s43, %s46
      %p52 = scmp.eq.s32.totalorder %s19, 0
      %p53 = por %p51, %p52
      %p54 = scmp.ne.s32.totalorder %s43, %s46
      %p55 = scmp.eq.s32.totalorder %s24, 3
      %p56 = por %p54, %p55
      %p57 = scmp.ne.s32.totalorder %s46, %s47
      %p58 = scmp.eq.s32.totalorder %s24, 0
      %p59 = por %p57, %p58
      %p60 = scmp.ne.s32.totalorder %s46, %s47
      %p61 = scmp.eq.s32.totalorder %s25, 3
      %p62 = por %p60, %p61
      %p64 = scmp.ne.s32.totalorder %s47, %s63
      %p65 = scmp.eq.s32.totalorder %s25, 0
      %p66 = por %p64, %p65
      %s67 = ssub.s32 %s26, %s38
      %p68 = scmp.eq.s32.totalorder %s67, 0
      %s70 = sadd.s32 %s69, 1
      %s71 = scalar_select %p68, %s69, %s70
      %p74 = pneg %p68
      %p75 = scmp.eq.s32.totalorder %s19, 3
      %p76 = por %p74, %p75
      %p77 = scmp.ne.s32.totalorder %s69, %s72
      %p78 = scmp.eq.s32.totalorder %s19, 0
      %p79 = por %p77, %p78
      %p80 = scmp.ne.s32.totalorder %s69, %s72
      %p81 = scmp.eq.s32.totalorder %s24, 3
      %p82 = por %p80, %p81
      %p83 = scmp.ne.s32.totalorder %s72, %s73
      %p84 = scmp.eq.s32.totalorder %s24, 0
      %p85 = por %p83, %p84
      %p86 = scmp.ne.s32.totalorder %s72, %s73
      %p87 = scmp.eq.s32.totalorder %s25, 3
      %p88 = por %p86, %p87
      %p90 = scmp.ne.s32.totalorder %s73, %s89
      %p91 = scmp.eq.s32.totalorder %s25, 0
      %p92 = por %p90, %p91
      %s94 = sadd.s32 %s93, 1
      %p97 = scmp.eq.s32.totalorder %s19, 3
      %p98 = scmp.ne.s32.totalorder %s93, %s95
      %p99 = scmp.eq.s32.totalorder %s19, 0
      %p100 = por %p98, %p99
      %p101 = scmp.ne.s32.totalorder %s93, %s95
      %p102 = scmp.eq.s32.totalorder %s24, 3
      %p103 = por %p101, %p102
      %p104 = scmp.ne.s32.totalorder %s95, %s96
      %p105 = scmp.eq.s32.totalorder %s24, 0
      %p106 = por %p104, %p105
      %p107 = scmp.ne.s32.totalorder %s95, %s96
      %p108 = scmp.eq.s32.totalorder %s25, 3
      %p109 = por %p107, %p108
      %p111 = scmp.ne.s32.totalorder %s96, %s110
      %p112 = scmp.eq.s32.totalorder %s25, 0
      %p113 = por %p111, %p112
      %s115 = sadd.s32 %s114, 1
      %p118 = scmp.eq.s32.totalorder %s19, 3
      %p119 = scmp.ne.s32.totalorder %s114, %s116
      %p120 = scmp.eq.s32.totalorder %s19, 0
      %p121 = por %p119, %p120
      %p122 = scmp.ne.s32.totalorder %s114, %s116
      %p123 = scmp.eq.s32.totalorder %s24, 3
      %p124 = por %p122, %p123
      %p125 = scmp.ne.s32.totalorder %s116, %s117
      %p126 = scmp.eq.s32.totalorder %s24, 0
      %p127 = por %p125, %p126
      %p128 = scmp.ne.s32.totalorder %s116, %s117
      %p129 = scmp.eq.s32.totalorder %s25, 3
      %p130 = por %p128, %p129
      %p132 = scmp.ne.s32.totalorder %s117, %s131
      %p133 = scmp.eq.s32.totalorder %s25, 0
      %p134 = por %p132, %p133
      %s135 = ssub.s32 %s26, %s38
      %s136 = ssub.s32 %s27, %s34
      %s137 = sor.u32 %s135, %s136
      %p138 = scmp.eq.s32.totalorder %s137, 0
      %s140 = sadd.s32 %s139, 1
      %s141 = scalar_select %p138, %s139, %s140
      %p144 = pneg %p138
      %p145 = scmp.eq.s32.totalorder %s19, 3
      %p146 = por %p144, %p145
      %p147 = scmp.ne.s32.totalorder %s139, %s142
      %p148 = scmp.eq.s32.totalorder %s19, 0
      %p149 = por %p147, %p148
      %p150 = scmp.ne.s32.totalorder %s139, %s142
      %p151 = scmp.eq.s32.totalorder %s24, 3
      %p152 = por %p150, %p151
      %p153 = scmp.ne.s32.totalorder %s142, %s143
      %p154 = scmp.eq.s32.totalorder %s24, 0
      %p155 = por %p153, %p154
      %p156 = scmp.ne.s32.totalorder %s142, %s143
      %p157 = scmp.eq.s32.totalorder %s25, 3
      %p158 = por %p156, %p157
      %p160 = scmp.ne.s32.totalorder %s143, %s159
      %p161 = scmp.eq.s32.totalorder %s25, 0
      %p162 = por %p160, %p161
      %s163 = ssub.s32 %s26, %s38
      %s164 = ssub.s32 %s27, %s34
      %s165 = sor.u32 %s163, %s164
      %p166 = scmp.eq.s32.totalorder %s165, 0
      %s168 = sadd.s32 %s167, 1
      %s169 = scalar_select %p166, %s167, %s168
      %p172 = pneg %p166
      %p173 = scmp.eq.s32.totalorder %s19, 3
      %p174 = por %p172, %p173
      %p175 = scmp.ne.s32.totalorder %s167, %s170
      %p176 = scmp.eq.s32.totalorder %s19, 0
      %p177 = por %p175, %p176
      %p178 = scmp.ne.s32.totalorder %s167, %s170
      %p179 = scmp.eq.s32.totalorder %s24, 3
      %p180 = por %p178, %p179
      %p181 = scmp.ne.s32.totalorder %s170, %s171
      %p182 = scmp.eq.s32.totalorder %s24, 0
      %p183 = por %p181, %p182
      %p184 = scmp.ne.s32.totalorder %s170, %s171
      %p185 = scmp.eq.s32.totalorder %s25, 3
      %p186 = por %p184, %p185
      %p188 = scmp.ne.s32.totalorder %s171, %s187
      %p189 = scmp.eq.s32.totalorder %s25, 0
      %p190 = por %p188, %p189
      %s191 = ssub.s32 %s26, %s38
      %s192 = ssub.s32 %s27, %s34
      %s193 = sor.u32 %s191, %s192
      %p194 = scmp.eq.s32.totalorder %s193, 0
      %s196 = sadd.s32 %s195, 1
      %s197 = scalar_select %p194, %s195, %s196
      %p200 = pneg %p194
      %p201 = scmp.eq.s32.totalorder %s19, 3
      %p202 = por %p200, %p201
      %p203 = scmp.ne.s32.totalorder %s195, %s198
      %p204 = scmp.eq.s32.totalorder %s19, 0
      %p205 = por %p203, %p204
      %p206 = scmp.ne.s32.totalorder %s195, %s198
      %p207 = scmp.eq.s32.totalorder %s24, 3
      %p208 = por %p206, %p207
      %p209 = scmp.ne.s32.totalorder %s198, %s199
      %p210 = scmp.eq.s32.totalorder %s24, 0
      %p211 = por %p209, %p210
      %p212 = scmp.ne.s32.totalorder %s198, %s199
      %p213 = scmp.eq.s32.totalorder %s25, 3
      %p214 = por %p212, %p213
      %p216 = scmp.ne.s32.totalorder %s199, %s215
      %p217 = scmp.eq.s32.totalorder %s25, 0
      %p218 = por %p216, %p217
      %p219 = scmp.le.s32.totalorder 1, %s19
      %p220 = scmp.lt.s32.totalorder %s19, 5
      %p221 = pnand %p219, %p220
      %p222 = pneg %p221
      // Predicated region
      $region9: #{tpu_custom_call.1} parent=5 // pred_check
        _
      $region10: #{tpu_custom_call.1} parent=5 // pred_check_branch
        %224 = sbr.rel (%p221) target = $region12
      $region11: #{tpu_custom_call.1} parent=5 // pred_region
        %s225 = ssub.s32 %s19, 1
        // Predicated region
        $region13: #{tpu_custom_call.1} parent=11 // pred_check
          %p226 = pneg %p106
        $region14: #{tpu_custom_call.1} parent=11 // pred_check_branch
          %228 = sbr.rel (%p226) target = $region16
        $region15: #{tpu_custom_call.1} parent=11 // pred_region
          _
        $region16: #{tpu_custom_call.1} parent=11 // pred_fallthru
          _
        // Predicated region
        $region17: #{tpu_custom_call.1} parent=11 // pred_check
          %p229 = pneg %p127
        $region18: #{tpu_custom_call.1} parent=11 // pred_check_branch
          %231 = sbr.rel (%p229) target = $region20
        $region19: #{tpu_custom_call.1} parent=11 // pred_region
          _
        $region20: #{tpu_custom_call.1} parent=11 // pred_fallthru
          _
      $region12: #{tpu_custom_call.1} parent=5 // pred_fallthru
        _
      %p232 = scmp.lt.s32.totalorder %s19, 4
      // Predicated region
      $region21: #{tpu_custom_call.1} parent=5 // pred_check
        %p233 = pneg %p232
      $region22: #{tpu_custom_call.1} parent=5 // pred_check_branch
        %235 = sbr.rel (%p233) target = $region24
      $region23: #{tpu_custom_call.1} parent=5 // pred_region
        // Predicated region
        $region25: #{tpu_custom_call.1} parent=23 // pred_check
          %p236 = pneg %p53
        $region26: #{tpu_custom_call.1} parent=23 // pred_check_branch
          %238 = sbr.rel (%p236) target = $region28
        $region27: #{tpu_custom_call.1} parent=23 // pred_region
          %p239 = scmp.lt.s32.totalorder %s26, 1
          %s240 = scalar_select %p239, %s26, 1
          %p241 = scmp.lt.s32.totalorder %s27, 1
          %s242 = scalar_select %p241, %s27, 1
          %s243 = smul.addr %s240, 2
          %s244 = sadd.s32 %s242, %s243
          %s245 = smul.addr %s244, 4
          %s246 = scalar_lea.vmem %s0, %s245
        $region28: #{tpu_custom_call.1} parent=23 // pred_fallthru
          _
        // Predicated region
        $region29: #{tpu_custom_call.1} parent=23 // pred_check
          %p247 = pneg %p79
        $region30: #{tpu_custom_call.1} parent=23 // pred_check_branch
          %249 = sbr.rel (%p247) target = $region32
        $region31: #{tpu_custom_call.1} parent=23 // pred_region
          %s250 = sand.u32 %s69, 1
          %s251 = scalar_lea.sflag [#allocation3], %s250
          %s252 = sand.u32 %s69, 1
          %s253 = smul.addr %s252, 8
          %s254 = scalar_lea.vmem [#allocation2], %s253
          %s256 = ssub.s32 128, 128
          %257 = vsyncadd %s251, %s256
          %s258 = smul.addr %s26, 2
          %s259 = smul.addr %s258, 64
          %s260 = scalar_lea.hbm %s1, %s259
          %s262 = sshll.u32 %s254, 4
          %s263 = int_to_ptr.vmem [resolvable:$true] %s262
          %265 = dma.hbm_to_vmem [thread:$0]  %s260, 128, %s263, %s251
        $region32: #{tpu_custom_call.1} parent=23 // pred_fallthru
          _
      $region24: #{tpu_custom_call.1} parent=5 // pred_fallthru
        _
      %p266 = scmp.le.s32.totalorder 1, %s19
      %p267 = scmp.lt.s32.totalorder %s19, 5
      %p268 = pnand %p266, %p267
      %p269 = pneg %p268
      // Predicated region
      $region33: #{tpu_custom_call.1} parent=5 // pred_check
        _
      $region34: #{tpu_custom_call.1} parent=5 // pred_check_branch
        %271 = sbr.rel (%p268) target = $region36
      $region35: #{tpu_custom_call.1} parent=5 // pred_region
        %s272 = ssub.s32 %s19, 1
        %s273 = sand.u32 %s72, 1
        %s274 = scalar_lea.sflag [#allocation3], %s273
        %s275 = sand.u32 %s72, 1
        %s276 = smul.addr %s275, 8
        %s277 = scalar_lea.vmem [#allocation2], %s276
        // Predicated region
        $region37: #{tpu_custom_call.1} parent=35 // pred_check
          %p278 = pneg %p85
        $region38: #{tpu_custom_call.1} parent=35 // pred_check_branch
          %280 = sbr.rel (%p278) target = $region40
        $region39: #{tpu_custom_call.1} parent=35 // pred_region
          %281 = dma.done %s274, 128
        $region40: #{tpu_custom_call.1} parent=35 // pred_fallthru
          _
        %p282 = scmp.lt.s32.totalorder %s28, 1
        %s283 = scalar_select %p282, %s28, 1
        %p284 = scmp.lt.s32.totalorder %s29, 1
        %s285 = scalar_select %p284, %s29, 1
        %s286 = smul.addr %s283, 2
        %s287 = sadd.s32 %s285, %s286
        %s288 = smul.addr %s287, 4
        %s289 = scalar_lea.vmem %s0, %s288
        %p290 = pneg %p59
        %p291 = pneg %p56
        %s292 = sand.u32 %s72, 1
        %s293 = scalar_lea.sflag [#allocation3], %s292
        %s294 = sand.u32 %s72, 1
        %s295 = smul.addr %s294, 8
        %s296 = scalar_lea.vmem [#allocation2], %s295
        %p297 = pneg %p85
        %p298 = pneg %p82
        %p299 = pneg %p106
        %p300 = pneg %p103
        %p301 = pneg %p127
        %p302 = pneg %p124
        %p303 = pneg %p155
        %p304 = pneg %p152
        %s305 = sand.u32 %s142, 1
        %s306 = scalar_lea.sflag [#allocation4], %s305
        %s307 = sand.u32 %s142, 1
        %s308 = smul.addr %s307, 8
        %s309 = scalar_lea.vmem [#allocation5], %s308
        %p310 = pneg %p183
        %p311 = pneg %p180
        %p312 = scmp.lt.s32.totalorder %s28, 1
        %s313 = scalar_select %p312, %s28, 1
        %p314 = scmp.lt.s32.totalorder %s29, 1
        %s315 = scalar_select %p314, %s29, 1
        %s316 = smul.addr %s313, 2
        %s317 = sadd.s32 %s315, %s316
        %s318 = smul.addr %s317, 8
        %s319 = scalar_lea.vmem %s5, %s318
        %p320 = pneg %p211
        %p321 = pneg %p208
        %p322 = scmp.lt.s32.totalorder %s28, 1
        %s323 = scalar_select %p322, %s28, 1
        %p324 = scmp.lt.s32.totalorder %s29, 1
        %s325 = scalar_select %p324, %s29, 1
        %s326 = smul.addr %s323, 2
        %s327 = sadd.s32 %s325, %s326
        %s328 = smul.addr %s327, 8
        %s329 = scalar_lea.vmem %s6, %s328
        %p330 = scmp.lt.s32.totalorder %s28, 1
        %s331 = scalar_select %p330, %s28, 1
        %p332 = scmp.lt.s32.totalorder %s29, 1
        %s333 = scalar_select %p332, %s29, 1
        %s334 = smul.addr %s331, 2
        %s335 = sadd.s32 %s333, %s334
        %s336 = smul.addr %s335, 4
        %s337 = scalar_lea.vmem %s0, %s336
        %p338 = scmp.lt.s32.totalorder %s28, 1
        %s339 = scalar_select %p338, %s28, 1
        %p340 = scmp.lt.s32.totalorder %s29, 1
        %s341 = scalar_select %p340, %s29, 1
        %s342 = smul.addr %s339, 2
        %s343 = sadd.s32 %s341, %s342
        %s344 = smul.addr %s343, 8
        %s345 = scalar_lea.vmem %s5, %s344
        %p346 = scmp.lt.s32.totalorder %s28, 1
        %s347 = scalar_select %p346, %s28, 1
        %p348 = scmp.lt.s32.totalorder %s29, 1
        %s349 = scalar_select %p348, %s29, 1
        %s350 = smul.addr %s347, 2
        %s351 = sadd.s32 %s349, %s350
        %s352 = smul.addr %s351, 8
        %s353 = scalar_lea.vmem %s6, %s352
        %v354 = vld [vmem:[%s337] sm:$0xf]
        %v355 = vld [vmem:[%s277] sm:$0xff]
        %v357 = vcombine.high %v355, %v355
        %359 = vxpose.xlu0.b32.start [1/16] %v355, 128
        %360 = vxpose.xlu0.b32.cont [2/16] 0.0, 128
        %361 = vxpose.xlu0.b32.cont [3/16] 0.0, 128
        %362 = vxpose.xlu0.b32.cont [4/16] 0.0, 128
        %363 = vxpose.xlu0.b32.cont [5/16] 0.0, 128
        %364 = vxpose.xlu0.b32.cont [6/16] 0.0, 128
        %365 = vxpose.xlu0.b32.cont [7/16] 0.0, 128
        %366 = vxpose.xlu0.b32.cont [8/16] 0.0, 128
        %367 = vxpose.xlu0.b32.cont [9/16] 0.0, 128
        %368 = vxpose.xlu0.b32.cont [10/16] 0.0, 128
        %369 = vxpose.xlu0.b32.cont [11/16] 0.0, 128
        %370 = vxpose.xlu0.b32.cont [12/16] 0.0, 128
        %371 = vxpose.xlu0.b32.cont [13/16] 0.0, 128
        %372 = vxpose.xlu0.b32.cont [14/16] 0.0, 128
        %373 = vxpose.xlu0.b32.cont [15/16] 0.0, 128
        %374 = vxpose.xlu0.b32.end [16/16] 0.0, 128
        %v375 = vpop.trf.xlu0
        %v376 = vpop.trf.xlu0
        %v377 = vpop.trf.xlu0
        %v378 = vpop.trf.xlu0
        %v379 = vpop.trf.xlu0
        %v380 = vpop.trf.xlu0
        %v381 = vpop.trf.xlu0
        %v382 = vpop.trf.xlu0
        %v383 = vpop.trf.xlu0
        %v384 = vpop.trf.xlu0
        %v385 = vpop.trf.xlu0
        %v386 = vpop.trf.xlu0
        %v387 = vpop.trf.xlu0
        %v388 = vpop.trf.xlu0
        %v389 = vpop.trf.xlu0
        %v390 = vpop.trf.xlu0
        %391 = vxpose.xlu0.b32.start [1/16] %v357, 128
        %392 = vxpose.xlu0.b32.cont [2/16] 0.0, 128
        %393 = vxpose.xlu0.b32.cont [3/16] 0.0, 128
        %394 = vxpose.xlu0.b32.cont [4/16] 0.0, 128
        %395 = vxpose.xlu0.b32.cont [5/16] 0.0, 128
        %396 = vxpose.xlu0.b32.cont [6/16] 0.0, 128
        %397 = vxpose.xlu0.b32.cont [7/16] 0.0, 128
        %398 = vxpose.xlu0.b32.cont [8/16] 0.0, 128
        %399 = vxpose.xlu0.b32.cont [9/16] 0.0, 128
        %400 = vxpose.xlu0.b32.cont [10/16] 0.0, 128
        %401 = vxpose.xlu0.b32.cont [11/16] 0.0, 128
        %402 = vxpose.xlu0.b32.cont [12/16] 0.0, 128
        %403 = vxpose.xlu0.b32.cont [13/16] 0.0, 128
        %404 = vxpose.xlu0.b32.cont [14/16] 0.0, 128
        %405 = vxpose.xlu0.b32.cont [15/16] 0.0, 128
        %406 = vxpose.xlu0.b32.end [16/16] 0.0, 128
        %v407 = vpop.trf.xlu0
        %v408 = vpop.trf.xlu0
        %v409 = vpop.trf.xlu0
        %v410 = vpop.trf.xlu0
        %v411 = vpop.trf.xlu0
        %v412 = vpop.trf.xlu0
        %v413 = vpop.trf.xlu0
        %v414 = vpop.trf.xlu0
        %v415 = vpop.trf.xlu0
        %v416 = vpop.trf.xlu0
        %v417 = vpop.trf.xlu0
        %v418 = vpop.trf.xlu0
        %v419 = vpop.trf.xlu0
        %v420 = vpop.trf.xlu0
        %v421 = vpop.trf.xlu0
        %v422 = vpop.trf.xlu0
        %vm423 = vcmask 31744
        %v425 = vsel %vm423, %v375, 0
        %v428 = vsel %vm423, %v376, 0
        %v431 = vsel %vm423, %v377, 0
        %v434 = vsel %vm423, %v378, 0
        %v437 = vsel %vm423, %v379, 0
        %v440 = vsel %vm423, %v380, 0
        %v443 = vsel %vm423, %v381, 0
        %v446 = vsel %vm423, %v382, 0
        %v449 = vsel %vm423, %v383, 0
        %v452 = vsel %vm423, %v384, 0
        %v455 = vsel %vm423, %v385, 0
        %v458 = vsel %vm423, %v386, 0
        %v461 = vsel %vm423, %v387, 0
        %v464 = vsel %vm423, %v388, 0
        %v467 = vsel %vm423, %v389, 0
        %v470 = vsel %vm423, %v390, 0
        %v473 = vsel %vm423, %v407, 0
        %v476 = vsel %vm423, %v408, 0
        %v479 = vsel %vm423, %v409, 0
        %v482 = vsel %vm423, %v410, 0
        %v485 = vsel %vm423, %v411, 0
        %v488 = vsel %vm423, %v412, 0
        %v491 = vsel %vm423, %v413, 0
        %v494 = vsel %vm423, %v414, 0
        %v497 = vsel %vm423, %v415, 0
        %v500 = vsel %vm423, %v416, 0
        %v503 = vsel %vm423, %v417, 0
        %v506 = vsel %vm423, %v418, 0
        %v509 = vsel %vm423, %v419, 0
        %v512 = vsel %vm423, %v420, 0
        %v515 = vsel %vm423, %v421, 0
        %v518 = vsel %vm423, %v422, 0
        %vm520 = vcmask 1043456
        %v522 = vsel %vm520, %v354, 0
        %524 = vmatprep.subr.mxu0 0.0
        %525 = vmatpush1.msra.mxu0 0.0
        %526 = vmatprep.subr.mxu0 0.0
        %527 = vmatpush1.msra.mxu0 0.0
        %528 = vmatprep.subr.mxu0 0.0
        %529 = vmatpush1.msra.mxu0 0.0
        %530 = vmatprep.subr.mxu0 0.0
        %531 = vmatpush1.msra.mxu0 0.0
        %532 = vmatprep.subr.mxu0 0.0
        %533 = vmatpush1.msra.mxu0 0.0
        %534 = vmatprep.subr.mxu0 0.0
        %535 = vmatpush1.msra.mxu0 0.0
        %536 = vmatprep.subr.mxu0 0.0
        %537 = vmatpush1.msra.mxu0 0.0
        %538 = vmatprep.subr.mxu0 0.0
        %539 = vmatpush1.msra.mxu0 0.0
        %540 = vmatprep.subr.mxu0 0.0
        %541 = vmatpush1.msra.mxu0 0.0
        %542 = vmatprep.subr.mxu0 0.0
        %543 = vmatpush1.msra.mxu0 0.0
        %544 = vmatprep.subr.mxu0 0.0
        %545 = vmatpush1.msra.mxu0 0.0
        %546 = vmatprep.subr.mxu0 0.0
        %547 = vmatpush1.msra.mxu0 0.0
        %548 = vmatprep.subr.mxu0 0.0
        %549 = vmatpush1.msra.mxu0 0.0
        %550 = vmatprep.subr.mxu0 0.0
        %551 = vmatpush1.msra.mxu0 0.0
        %552 = vmatprep.subr.mxu0 0.0
        %553 = vmatpush1.msra.mxu0 0.0
        %554 = vmatprep.subr.mxu0 0.0
        %555 = vmatpush1.msra.mxu0 %v522
        %556 = vmatprep.subr.mxu0 0.0
        %557 = vmatpush2.msra.mxu0 0.0
        %558 = vmatprep.subr.mxu0 0.0
        %559 = vmatpush2.msra.mxu0 0.0
        %560 = vmatprep.subr.mxu0 0.0
        %561 = vmatpush2.msra.mxu0 0.0
        %562 = vmatprep.subr.mxu0 0.0
        %563 = vmatpush2.msra.mxu0 0.0
        %564 = vmatprep.subr.mxu0 0.0
        %565 = vmatpush2.msra.mxu0 0.0
        %566 = vmatprep.subr.mxu0 0.0
        %567 = vmatpush2.msra.mxu0 0.0
        %568 = vmatprep.subr.mxu0 0.0
        %569 = vmatpush2.msra.mxu0 0.0
        %570 = vmatprep.subr.mxu0 0.0
        %571 = vmatpush2.msra.mxu0 0.0
        %572 = vmatprep.subr.mxu0 0.0
        %573 = vmatpush2.msra.mxu0 0.0
        %574 = vmatprep.subr.mxu0 0.0
        %575 = vmatpush2.msra.mxu0 0.0
        %576 = vmatprep.subr.mxu0 0.0
        %577 = vmatpush2.msra.mxu0 0.0
        %578 = vmatprep.subr.mxu0 0.0
        %579 = vmatpush2.msra.mxu0 0.0
        %580 = vmatprep.subr.mxu0 0.0
        %581 = vmatpush2.msra.mxu0 0.0
        %582 = vmatprep.subr.mxu0 0.0
        %583 = vmatpush2.msra.mxu0 0.0
        %584 = vmatprep.subr.mxu0 0.0
        %585 = vmatpush2.msra.mxu0 0.0
        %586 = vmatprep.subr.mxu0 0.0
        %587 = vmatpush2.msra.mxu0 0.0
        %588 = vmatprep.mubr.f32.mxu0 0.0
        %589 = vmatmul.mubr.f32.gmra.mxu0 %v425
        %v590 = vpop.f32.mrf.mxu0
        %v591 = vadd.f32 0.0, %v590
        %v592 = vpop.f32.mrf.mxu0
        %593 = vmatprep.mubr.f32.mxu0 0.0
        %594 = vmatmul.mubr.f32.gmra.mxu0 %v428
        %v595 = vpop.f32.mrf.mxu0
        %v596 = vadd.f32 0.0, %v595
        %v597 = vpop.f32.mrf.mxu0
        %598 = vmatprep.mubr.f32.mxu0 0.0
        %599 = vmatmul.mubr.f32.gmra.mxu0 %v431
        %v600 = vpop.f32.mrf.mxu0
        %v601 = vadd.f32 0.0, %v600
        %v602 = vpop.f32.mrf.mxu0
        %603 = vmatprep.mubr.f32.mxu0 0.0
        %604 = vmatmul.mubr.f32.gmra.mxu0 %v434
        %v605 = vpop.f32.mrf.mxu0
        %v606 = vadd.f32 0.0, %v605
        %v607 = vpop.f32.mrf.mxu0
        %608 = vmatprep.mubr.f32.mxu0 0.0
        %609 = vmatmul.mubr.f32.gmra.mxu0 %v437
        %v610 = vpop.f32.mrf.mxu0
        %v611 = vadd.f32 0.0, %v610
        %v612 = vpop.f32.mrf.mxu0
        %613 = vmatprep.mubr.f32.mxu0 0.0
        %614 = vmatmul.mubr.f32.gmra.mxu0 %v440
        %v615 = vpop.f32.mrf.mxu0
        %v616 = vadd.f32 0.0, %v615
        %v617 = vpop.f32.mrf.mxu0
        %618 = vmatprep.mubr.f32.mxu0 0.0
        %619 = vmatmul.mubr.f32.gmra.mxu0 %v443
        %v620 = vpop.f32.mrf.mxu0
        %v621 = vadd.f32 0.0, %v620
        %v622 = vpop.f32.mrf.mxu0
        %623 = vmatprep.mubr.f32.mxu0 0.0
        %624 = vmatmul.mubr.f32.gmra.mxu0 %v446
        %v625 = vpop.f32.mrf.mxu0
        %v626 = vadd.f32 0.0, %v625
        %v627 = vpop.f32.mrf.mxu0
        %628 = vmatprep.mubr.f32.mxu0 0.0
        %629 = vmatmul.mubr.f32.gmra.mxu0 %v449
        %v630 = vpop.f32.mrf.mxu0
        %v631 = vadd.f32 0.0, %v630
        %v632 = vpop.f32.mrf.mxu0
        %633 = vmatprep.mubr.f32.mxu0 0.0
        %634 = vmatmul.mubr.f32.gmra.mxu0 %v452
        %v635 = vpop.f32.mrf.mxu0
        %v636 = vadd.f32 0.0, %v635
        %v637 = vpop.f32.mrf.mxu0
        %638 = vmatprep.mubr.f32.mxu0 0.0
        %639 = vmatmul.mubr.f32.gmra.mxu0 %v455
        %v640 = vpop.f32.mrf.mxu0
        %v641 = vadd.f32 0.0, %v640
        %v642 = vpop.f32.mrf.mxu0
        %643 = vmatprep.mubr.f32.mxu0 0.0
        %644 = vmatmul.mubr.f32.gmra.mxu0 %v458
        %v645 = vpop.f32.mrf.mxu0
        %v646 = vadd.f32 0.0, %v645
        %v647 = vpop.f32.mrf.mxu0
        %648 = vmatprep.mubr.f32.mxu0 0.0
        %649 = vmatmul.mubr.f32.gmra.mxu0 %v461
        %v650 = vpop.f32.mrf.mxu0
        %v651 = vadd.f32 0.0, %v650
        %v652 = vpop.f32.mrf.mxu0
        %653 = vmatprep.mubr.f32.mxu0 0.0
        %654 = vmatmul.mubr.f32.gmra.mxu0 %v464
        %v655 = vpop.f32.mrf.mxu0
        %v656 = vadd.f32 0.0, %v655
        %v657 = vpop.f32.mrf.mxu0
        %658 = vmatprep.mubr.f32.mxu0 0.0
        %659 = vmatmul.mubr.f32.gmra.mxu0 %v467
        %v660 = vpop.f32.mrf.mxu0
        %v661 = vadd.f32 0.0, %v660
        %v662 = vpop.f32.mrf.mxu0
        %663 = vmatprep.mubr.f32.mxu0 0.0
        %664 = vmatmul.mubr.f32.gmra.mxu0 %v470
        %v665 = vpop.f32.mrf.mxu0
        %v666 = vadd.f32 0.0, %v665
        %v667 = vpop.f32.mrf.mxu0
        %668 = vmatprep.mubr.f32.mxu0 0.0
        %669 = vmatmul.mubr.f32.gmra.mxu0 %v473
        %v670 = vpop.f32.mrf.mxu0
        %v671 = vadd.f32 0.0, %v670
        %v672 = vpop.f32.mrf.mxu0
        %673 = vmatprep.mubr.f32.mxu0 0.0
        %674 = vmatmul.mubr.f32.gmra.mxu0 %v476
        %v675 = vpop.f32.mrf.mxu0
        %v676 = vadd.f32 0.0, %v675
        %v677 = vpop.f32.mrf.mxu0
        %678 = vmatprep.mubr.f32.mxu0 0.0
        %679 = vmatmul.mubr.f32.gmra.mxu0 %v479
        %v680 = vpop.f32.mrf.mxu0
        %v681 = vadd.f32 0.0, %v680
        %v682 = vpop.f32.mrf.mxu0
        %683 = vmatprep.mubr.f32.mxu0 0.0
        %684 = vmatmul.mubr.f32.gmra.mxu0 %v482
        %v685 = vpop.f32.mrf.mxu0
        %v686 = vadd.f32 0.0, %v685
        %v687 = vpop.f32.mrf.mxu0
        %688 = vmatprep.mubr.f32.mxu0 0.0
        %689 = vmatmul.mubr.f32.gmra.mxu0 %v485
        %v690 = vpop.f32.mrf.mxu0
        %v691 = vadd.f32 0.0, %v690
        %v692 = vpop.f32.mrf.mxu0
        %693 = vmatprep.mubr.f32.mxu0 0.0
        %694 = vmatmul.mubr.f32.gmra.mxu0 %v488
        %v695 = vpop.f32.mrf.mxu0
        %v696 = vadd.f32 0.0, %v695
        %v697 = vpop.f32.mrf.mxu0
        %698 = vmatprep.mubr.f32.mxu0 0.0
        %699 = vmatmul.mubr.f32.gmra.mxu0 %v491
        %v700 = vpop.f32.mrf.mxu0
        %v701 = vadd.f32 0.0, %v700
        %v702 = vpop.f32.mrf.mxu0
        %703 = vmatprep.mubr.f32.mxu0 0.0
        %704 = vmatmul.mubr.f32.gmra.mxu0 %v494
        %v705 = vpop.f32.mrf.mxu0
        %v706 = vadd.f32 0.0, %v705
        %v707 = vpop.f32.mrf.mxu0
        %708 = vmatprep.mubr.f32.mxu0 0.0
        %709 = vmatmul.mubr.f32.gmra.mxu0 %v497
        %v710 = vpop.f32.mrf.mxu0
        %v711 = vadd.f32 0.0, %v710
        %v712 = vpop.f32.mrf.mxu0
        %713 = vmatprep.mubr.f32.mxu0 0.0
        %714 = vmatmul.mubr.f32.gmra.mxu0 %v500
        %v715 = vpop.f32.mrf.mxu0
        %v716 = vadd.f32 0.0, %v715
        %v717 = vpop.f32.mrf.mxu0
        %718 = vmatprep.mubr.f32.mxu0 0.0
        %719 = vmatmul.mubr.f32.gmra.mxu0 %v503
        %v720 = vpop.f32.mrf.mxu0
        %v721 = vadd.f32 0.0, %v720
        %v722 = vpop.f32.mrf.mxu0
        %723 = vmatprep.mubr.f32.mxu0 0.0
        %724 = vmatmul.mubr.f32.gmra.mxu0 %v506
        %v725 = vpop.f32.mrf.mxu0
        %v726 = vadd.f32 0.0, %v725
        %v727 = vpop.f32.mrf.mxu0
        %728 = vmatprep.mubr.f32.mxu0 0.0
        %729 = vmatmul.mubr.f32.gmra.mxu0 %v509
        %v730 = vpop.f32.mrf.mxu0
        %v731 = vadd.f32 0.0, %v730
        %v732 = vpop.f32.mrf.mxu0
        %733 = vmatprep.mubr.f32.mxu0 0.0
        %734 = vmatmul.mubr.f32.gmra.mxu0 %v512
        %v735 = vpop.f32.mrf.mxu0
        %v736 = vadd.f32 0.0, %v735
        %v737 = vpop.f32.mrf.mxu0
        %738 = vmatprep.mubr.f32.mxu0 0.0
        %739 = vmatmul.mubr.f32.gmra.mxu0 %v515
        %v740 = vpop.f32.mrf.mxu0
        %v741 = vadd.f32 0.0, %v740
        %v742 = vpop.f32.mrf.mxu0
        %743 = vmatprep.mubr.f32.mxu0 0.0
        %744 = vmatmul.mubr.f32.gmra.mxu0 %v518
        %v745 = vpop.f32.mrf.mxu0
        %v746 = vadd.f32 0.0, %v745
        %v747 = vpop.f32.mrf.mxu0
        %748 = vdwg.mxu0
        %v749 = vmax.f32 %v591, %v611
        %v750 = vmax.f32 %v596, %v616
        %v751 = vmax.f32 %v601, %v621
        %v752 = vmax.f32 %v606, %v626
        %v753 = vmax.f32 %v749, %v631
        %v754 = vmax.f32 %v750, %v636
        %v755 = vmax.f32 %v751, %v641
        %v756 = vmax.f32 %v752, %v646
        %v757 = vmax.f32 %v753, %v651
        %v758 = vmax.f32 %v754, %v656
        %v759 = vmax.f32 %v755, %v661
        %v760 = vmax.f32 %v756, %v666
        %v761 = vmax.f32 %v757, %v671
        %v762 = vmax.f32 %v758, %v676
        %v763 = vmax.f32 %v759, %v681
        %v764 = vmax.f32 %v760, %v686
        %v765 = vmax.f32 %v761, %v691
        %v766 = vmax.f32 %v762, %v696
        %v767 = vmax.f32 %v763, %v701
        %v768 = vmax.f32 %v764, %v706
        %v769 = vmax.f32 %v765, %v711
        %v770 = vmax.f32 %v766, %v716
        %v771 = vmax.f32 %v767, %v721
        %v772 = vmax.f32 %v768, %v726
        %v773 = vmax.f32 %v769, %v731
        %v774 = vmax.f32 %v770, %v736
        %v775 = vmax.f32 %v771, %v741
        %v776 = vmax.f32 %v772, %v746
        %v777 = vmax.f32 %v773, %v774
        %v778 = vmax.f32 %v775, %v776
        %v779 = vmax.f32 %v777, %v778
        %v780 = vrot.slane %v779, 4
        %v781 = vmax.f32 %v779, %v780
        %v782 = vrot.slane %v781, 2
        %v783 = vmax.f32 %v781, %v782
        %v784 = vrot.slane %v783, 1
        %v785 = vmax.f32 %v783, %v784
        %v786 = vsub.f32 %v591, %v785
        %v787 = vsub.f32 %v596, %v785
        %v788 = vsub.f32 %v601, %v785
        %v789 = vsub.f32 %v606, %v785
        %v790 = vsub.f32 %v611, %v785
        %v791 = vsub.f32 %v616, %v785
        %v792 = vsub.f32 %v621, %v785
        %v793 = vsub.f32 %v626, %v785
        %v794 = vsub.f32 %v631, %v785
        %v795 = vsub.f32 %v636, %v785
        %v796 = vsub.f32 %v641, %v785
        %v797 = vsub.f32 %v646, %v785
        %v798 = vsub.f32 %v651, %v785
        %v799 = vsub.f32 %v656, %v785
        %v800 = vsub.f32 %v661, %v785
        %v801 = vsub.f32 %v666, %v785
        %v802 = vsub.f32 %v671, %v785
        %v803 = vsub.f32 %v676, %v785
        %v804 = vsub.f32 %v681, %v785
        %v805 = vsub.f32 %v686, %v785
        %v806 = vsub.f32 %v691, %v785
        %v807 = vsub.f32 %v696, %v785
        %v808 = vsub.f32 %v701, %v785
        %v809 = vsub.f32 %v706, %v785
        %v810 = vsub.f32 %v711, %v785
        %v811 = vsub.f32 %v716, %v785
        %v812 = vsub.f32 %v721, %v785
        %v813 = vsub.f32 %v726, %v785
        %v814 = vsub.f32 %v731, %v785
        %v815 = vsub.f32 %v736, %v785
        %v816 = vsub.f32 %v741, %v785
        %v817 = vsub.f32 %v746, %v785
        %v818 = vmul.f32 %v786, 1.442695
        %v819 = vpow.pop %v818
        %v820 = vmul.f32 %v787, 1.442695
        %v821 = vpow.pop %v820
        %v822 = vmul.f32 %v788, 1.442695
        %v823 = vpow.pop %v822
        %v824 = vmul.f32 %v789, 1.442695
        %v825 = vpow.pop %v824
        %v826 = vmul.f32 %v790, 1.442695
        %v827 = vpow.pop %v826
        %v828 = vmul.f32 %v791, 1.442695
        %v829 = vpow.pop %v828
        %v830 = vmul.f32 %v792, 1.442695
        %v831 = vpow.pop %v830
        %v832 = vmul.f32 %v793, 1.442695
        %v833 = vpow.pop %v832
        %v834 = vmul.f32 %v794, 1.442695
        %v835 = vpow.pop %v834
        %v836 = vmul.f32 %v795, 1.442695
        %v837 = vpow.pop %v836
        %v838 = vmul.f32 %v796, 1.442695
        %v839 = vpow.pop %v838
        %v840 = vmul.f32 %v797, 1.442695
        %v841 = vpow.pop %v840
        %v842 = vmul.f32 %v798, 1.442695
        %v843 = vpow.pop %v842
        %v844 = vmul.f32 %v799, 1.442695
        %v845 = vpow.pop %v844
        %v846 = vmul.f32 %v800, 1.442695
        %v847 = vpow.pop %v846
        %v848 = vmul.f32 %v801, 1.442695
        %v849 = vpow.pop %v848
        %v850 = vmul.f32 %v802, 1.442695
        %v851 = vpow.pop %v850
        %v852 = vmul.f32 %v803, 1.442695
        %v853 = vpow.pop %v852
        %v854 = vmul.f32 %v804, 1.442695
        %v855 = vpow.pop %v854
        %v856 = vmul.f32 %v805, 1.442695
        %v857 = vpow.pop %v856
        %v858 = vmul.f32 %v806, 1.442695
        %v859 = vpow.pop %v858
        %v860 = vmul.f32 %v807, 1.442695
        %v861 = vpow.pop %v860
        %v862 = vmul.f32 %v808, 1.442695
        %v863 = vpow.pop %v862
        %v864 = vmul.f32 %v809, 1.442695
        %v865 = vpow.pop %v864
        %v866 = vmul.f32 %v810, 1.442695
        %v867 = vpow.pop %v866
        %v868 = vmul.f32 %v811, 1.442695
        %v869 = vpow.pop %v868
        %v870 = vmul.f32 %v812, 1.442695
        %v871 = vpow.pop %v870
        %v872 = vmul.f32 %v813, 1.442695
        %v873 = vpow.pop %v872
        %v874 = vmul.f32 %v814, 1.442695
        %v875 = vpow.pop %v874
        %v876 = vmul.f32 %v815, 1.442695
        %v877 = vpow.pop %v876
        %v878 = vmul.f32 %v816, 1.442695
        %v879 = vpow.pop %v878
        %v880 = vmul.f32 %v817, 1.442695
        %v881 = vpow.pop %v880
        %v882 = vadd.f32 %v819, %v821
        %v883 = vadd.f32 %v882, %v823
        %v884 = vadd.f32 %v883, %v825
        %v885 = vadd.f32 %v884, %v827
        %v886 = vadd.f32 %v885, %v829
        %v887 = vadd.f32 %v886, %v831
        %v888 = vadd.f32 %v887, %v833
        %v889 = vadd.f32 %v888, %v835
        %v890 = vadd.f32 %v889, %v837
        %v891 = vadd.f32 %v890, %v839
        %v892 = vadd.f32 %v891, %v841
        %v893 = vadd.f32 %v892, %v843
        %v894 = vadd.f32 %v893, %v845
        %v895 = vadd.f32 %v894, %v847
        %v896 = vadd.f32 %v895, %v849
        %v897 = vadd.f32 %v896, %v851
        %v898 = vadd.f32 %v897, %v853
        %v899 = vadd.f32 %v898, %v855
        %v900 = vadd.f32 %v899, %v857
        %v901 = vadd.f32 %v900, %v859
        %v902 = vadd.f32 %v901, %v861
        %v903 = vadd.f32 %v902, %v863
        %v904 = vadd.f32 %v903, %v865
        %v905 = vadd.f32 %v904, %v867
        %v906 = vadd.f32 %v905, %v869
        %v907 = vadd.f32 %v906, %v871
        %v908 = vadd.f32 %v907, %v873
        %v909 = vadd.f32 %v908, %v875
        %v910 = vadd.f32 %v909, %v877
        %v911 = vadd.f32 %v910, %v879
        %v912 = vadd.f32 %v911, %v881
        %v913 = vrot.slane %v912, 4
        %v914 = vadd.f32 %v912, %v913
        %v915 = vrot.slane %v914, 2
        %v916 = vadd.f32 %v914, %v915
        %v917 = vrot.slane %v916, 1
        %v918 = vadd.f32 %v916, %v917
        %919 = vmatprep.subr.mxu0 0.0
        %920 = vmatpush1.msra.mxu0 %v849
        %921 = vmatprep.subr.mxu0 0.0
        %922 = vmatpush1.msra.mxu0 %v847
        %923 = vmatprep.subr.mxu0 0.0
        %924 = vmatpush1.msra.mxu0 %v845
        %925 = vmatprep.subr.mxu0 0.0
        %926 = vmatpush1.msra.mxu0 %v843
        %927 = vmatprep.subr.mxu0 0.0
        %928 = vmatpush1.msra.mxu0 %v841
        %929 = vmatprep.subr.mxu0 0.0
        %930 = vmatpush1.msra.mxu0 %v839
        %931 = vmatprep.subr.mxu0 0.0
        %932 = vmatpush1.msra.mxu0 %v837
        %933 = vmatprep.subr.mxu0 0.0
        %934 = vmatpush1.msra.mxu0 %v835
        %935 = vmatprep.subr.mxu0 0.0
        %936 = vmatpush1.msra.mxu0 %v833
        %937 = vmatprep.subr.mxu0 0.0
        %938 = vmatpush1.msra.mxu0 %v831
        %939 = vmatprep.subr.mxu0 0.0
        %940 = vmatpush1.msra.mxu0 %v829
        %941 = vmatprep.subr.mxu0 0.0
        %942 = vmatpush1.msra.mxu0 %v827
        %943 = vmatprep.subr.mxu0 0.0
        %944 = vmatpush1.msra.mxu0 %v825
        %945 = vmatprep.subr.mxu0 0.0
        %946 = vmatpush1.msra.mxu0 %v823
        %947 = vmatprep.subr.mxu0 0.0
        %948 = vmatpush1.msra.mxu0 %v821
        %949 = vmatprep.subr.mxu0 0.0
        %950 = vmatpush1.msra.mxu0 %v819
        %951 = vmatprep.subr.mxu0 0.0
        %952 = vmatpush2.msra.mxu0 %v881
        %953 = vmatprep.subr.mxu0 0.0
        %954 = vmatpush2.msra.mxu0 %v879
        %955 = vmatprep.subr.mxu0 0.0
        %956 = vmatpush2.msra.mxu0 %v877
        %957 = vmatprep.subr.mxu0 0.0
        %958 = vmatpush2.msra.mxu0 %v875
        %959 = vmatprep.subr.mxu0 0.0
        %960 = vmatpush2.msra.mxu0 %v873
        %961 = vmatprep.subr.mxu0 0.0
        %962 = vmatpush2.msra.mxu0 %v871
        %963 = vmatprep.subr.mxu0 0.0
        %964 = vmatpush2.msra.mxu0 %v869
        %965 = vmatprep.subr.mxu0 0.0
        %966 = vmatpush2.msra.mxu0 %v867
        %967 = vmatprep.subr.mxu0 0.0
        %968 = vmatpush2.msra.mxu0 %v865
        %969 = vmatprep.subr.mxu0 0.0
        %970 = vmatpush2.msra.mxu0 %v863
        %971 = vmatprep.subr.mxu0 0.0
        %972 = vmatpush2.msra.mxu0 %v861
        %973 = vmatprep.subr.mxu0 0.0
        %974 = vmatpush2.msra.mxu0 %v859
        %975 = vmatprep.subr.mxu0 0.0
        %976 = vmatpush2.msra.mxu0 %v857
        %977 = vmatprep.subr.mxu0 0.0
        %978 = vmatpush2.msra.mxu0 %v855
        %979 = vmatprep.subr.mxu0 0.0
        %980 = vmatpush2.msra.mxu0 %v853
        %981 = vmatprep.subr.mxu0 0.0
        %982 = vmatpush2.msra.mxu0 %v851
        %983 = vmatprep.mubr.f32.mxu0 %v357
        %984 = vmatmul.mubr.f32.gmra.mxu0 %v355
        %v985 = vpop.f32.mrf.mxu0
        %v986 = vadd.f32 0.0, %v985
        %v987 = vpop.f32.mrf.mxu0
        %988 = vdwg.mxu0
        %v989 = vrcp.pop %v918
        %v990 = vmul.f32 %v986, %v989
        %v991 = vsub.f32 %v354, %v990
        %v992 = vmax.f32 %v991, 0.0
        %v993 = vld [vmem:[%s2] sm:$0xff]
        %v994 = vld [vmem:[%s3] sm:$0xff]
        %v996 = vsel %vm423, %v994, 0
        %v999 = vsel %vm520, %v992, 0
        %1001 = vmatprep.subr.mxu0 0.0
        %1002 = vmatpush1.msra.mxu0 0.0
        %1003 = vmatprep.subr.mxu0 0.0
        %1004 = vmatpush1.msra.mxu0 0.0
        %1005 = vmatprep.subr.mxu0 0.0
        %1006 = vmatpush1.msra.mxu0 0.0
        %1007 = vmatprep.subr.mxu0 0.0
        %1008 = vmatpush1.msra.mxu0 0.0
        %1009 = vmatprep.subr.mxu0 0.0
        %1010 = vmatpush1.msra.mxu0 0.0
        %1011 = vmatprep.subr.mxu0 0.0
        %1012 = vmatpush1.msra.mxu0 0.0
        %1013 = vmatprep.subr.mxu0 0.0
        %1014 = vmatpush1.msra.mxu0 0.0
        %1015 = vmatprep.subr.mxu0 0.0
        %1016 = vmatpush1.msra.mxu0 0.0
        %1017 = vmatprep.subr.mxu0 0.0
        %1018 = vmatpush1.msra.mxu0 0.0
        %1019 = vmatprep.subr.mxu0 0.0
        %1020 = vmatpush1.msra.mxu0 0.0
        %1021 = vmatprep.subr.mxu0 0.0
        %1022 = vmatpush1.msra.mxu0 0.0
        %1023 = vmatprep.subr.mxu0 0.0
        %1024 = vmatpush1.msra.mxu0 0.0
        %1025 = vmatprep.subr.mxu0 0.0
        %1026 = vmatpush1.msra.mxu0 0.0
        %1027 = vmatprep.subr.mxu0 0.0
        %1028 = vmatpush1.msra.mxu0 0.0
        %1029 = vmatprep.subr.mxu0 0.0
        %1030 = vmatpush1.msra.mxu0 0.0
        %1031 = vmatprep.subr.mxu0 0.0
        %1032 = vmatpush1.msra.mxu0 %v999
        %1033 = vmatprep.subr.mxu0 0.0
        %1034 = vmatpush2.msra.mxu0 0.0
        %1035 = vmatprep.subr.mxu0 0.0
        %1036 = vmatpush2.msra.mxu0 0.0
        %1037 = vmatprep.subr.mxu0 0.0
        %1038 = vmatpush2.msra.mxu0 0.0
        %1039 = vmatprep.subr.mxu0 0.0
        %1040 = vmatpush2.msra.mxu0 0.0
        %1041 = vmatprep.subr.mxu0 0.0
        %1042 = vmatpush2.msra.mxu0 0.0
        %1043 = vmatprep.subr.mxu0 0.0
        %1044 = vmatpush2.msra.mxu0 0.0
        %1045 = vmatprep.subr.mxu0 0.0
        %1046 = vmatpush2.msra.mxu0 0.0
        %1047 = vmatprep.subr.mxu0 0.0
        %1048 = vmatpush2.msra.mxu0 0.0
        %1049 = vmatprep.subr.mxu0 0.0
        %1050 = vmatpush2.msra.mxu0 0.0
        %1051 = vmatprep.subr.mxu0 0.0
        %1052 = vmatpush2.msra.mxu0 0.0
        %1053 = vmatprep.subr.mxu0 0.0
        %1054 = vmatpush2.msra.mxu0 0.0
        %1055 = vmatprep.subr.mxu0 0.0
        %1056 = vmatpush2.msra.mxu0 0.0
        %1057 = vmatprep.subr.mxu0 0.0
        %1058 = vmatpush2.msra.mxu0 0.0
        %1059 = vmatprep.subr.mxu0 0.0
        %1060 = vmatpush2.msra.mxu0 0.0
        %1061 = vmatprep.subr.mxu0 0.0
        %1062 = vmatpush2.msra.mxu0 0.0
        %1063 = vmatprep.subr.mxu0 0.0
        %1064 = vmatpush2.msra.mxu0 0.0
        %1065 = vmatprep.mubr.f32.mxu0 0.0
        %1066 = vmatmul.mubr.f32.gmra.mxu0 %v996
        %v1067 = vpop.f32.mrf.mxu0
        %v1068 = vadd.f32 0.0, %v1067
        %v1069 = vpop.f32.mrf.mxu0
        %1070 = vdwg.mxu0
        %v1072 = vsel %vm423, %v993, 0
        %1074 = vmatprep.subr.mxu0 0.0
        %1075 = vmatpush1.msra.mxu0 0.0
        %1076 = vmatprep.subr.mxu0 0.0
        %1077 = vmatpush1.msra.mxu0 0.0
        %1078 = vmatprep.subr.mxu0 0.0
        %1079 = vmatpush1.msra.mxu0 0.0
        %1080 = vmatprep.subr.mxu0 0.0
        %1081 = vmatpush1.msra.mxu0 0.0
        %1082 = vmatprep.subr.mxu0 0.0
        %1083 = vmatpush1.msra.mxu0 0.0
        %1084 = vmatprep.subr.mxu0 0.0
        %1085 = vmatpush1.msra.mxu0 0.0
        %1086 = vmatprep.subr.mxu0 0.0
        %1087 = vmatpush1.msra.mxu0 0.0
        %1088 = vmatprep.subr.mxu0 0.0
        %1089 = vmatpush1.msra.mxu0 0.0
        %1090 = vmatprep.subr.mxu0 0.0
        %1091 = vmatpush1.msra.mxu0 0.0
        %1092 = vmatprep.subr.mxu0 0.0
        %1093 = vmatpush1.msra.mxu0 0.0
        %1094 = vmatprep.subr.mxu0 0.0
        %1095 = vmatpush1.msra.mxu0 0.0
        %1096 = vmatprep.subr.mxu0 0.0
        %1097 = vmatpush1.msra.mxu0 0.0
        %1098 = vmatprep.subr.mxu0 0.0
        %1099 = vmatpush1.msra.mxu0 0.0
        %1100 = vmatprep.subr.mxu0 0.0
        %1101 = vmatpush1.msra.mxu0 0.0
        %1102 = vmatprep.subr.mxu0 0.0
        %1103 = vmatpush1.msra.mxu0 0.0
        %1104 = vmatprep.subr.mxu0 0.0
        %1105 = vmatpush1.msra.mxu0 %v522
        %1106 = vmatprep.subr.mxu0 0.0
        %1107 = vmatpush2.msra.mxu0 0.0
        %1108 = vmatprep.subr.mxu0 0.0
        %1109 = vmatpush2.msra.mxu0 0.0
        %1110 = vmatprep.subr.mxu0 0.0
        %1111 = vmatpush2.msra.mxu0 0.0
        %1112 = vmatprep.subr.mxu0 0.0
        %1113 = vmatpush2.msra.mxu0 0.0
        %1114 = vmatprep.subr.mxu0 0.0
        %1115 = vmatpush2.msra.mxu0 0.0
        %1116 = vmatprep.subr.mxu0 0.0
        %1117 = vmatpush2.msra.mxu0 0.0
        %1118 = vmatprep.subr.mxu0 0.0
        %1119 = vmatpush2.msra.mxu0 0.0
        %1120 = vmatprep.subr.mxu0 0.0
        %1121 = vmatpush2.msra.mxu0 0.0
        %1122 = vmatprep.subr.mxu0 0.0
        %1123 = vmatpush2.msra.mxu0 0.0
        %1124 = vmatprep.subr.mxu0 0.0
        %1125 = vmatpush2.msra.mxu0 0.0
        %1126 = vmatprep.subr.mxu0 0.0
        %1127 = vmatpush2.msra.mxu0 0.0
        %1128 = vmatprep.subr.mxu0 0.0
        %1129 = vmatpush2.msra.mxu0 0.0
        %1130 = vmatprep.subr.mxu0 0.0
        %1131 = vmatpush2.msra.mxu0 0.0
        %1132 = vmatprep.subr.mxu0 0.0
        %1133 = vmatpush2.msra.mxu0 0.0
        %1134 = vmatprep.subr.mxu0 0.0
        %1135 = vmatpush2.msra.mxu0 0.0
        %1136 = vmatprep.subr.mxu0 0.0
        %1137 = vmatpush2.msra.mxu0 0.0
        %1138 = vmatprep.mubr.f32.mxu0 0.0
        %1139 = vmatmul.mubr.f32.gmra.mxu0 %v1072
        %v1140 = vpop.f32.mrf.mxu0
        %v1141 = vadd.f32 %v1068, %v1140
        %v1142 = vpop.f32.mrf.mxu0
        %1143 = vdwg.mxu0
        %1144 = vst [vmem:[%s309] sm:$0xff] %v1141
        %1145 = vadd.xlane.f32.xlu0 %v1141
        %v1146 = vpop.xlane.xlu0 %1145
        %vm1147 = vcmask 7168
        %1148 = vst.msk [vmem:[%s345] sm:$0xff] %vm1147, %v1146
        %v1149 = vmul.f32 %v1141, %v1141
        %1150 = vadd.xlane.f32.xlu0 %v1149
        %v1151 = vpop.xlane.xlu0 %1150
        %1152 = vst.msk [vmem:[%s353] sm:$0xff] %vm1147, %v1151
        %s1153 = sand.u32 %s142, 1
        %s1154 = scalar_lea.sflag [#allocation4], %s1153
        %s1155 = sand.u32 %s142, 1
        %s1156 = smul.addr %s1155, 8
        %s1157 = scalar_lea.vmem [#allocation5], %s1156
        %p1158 = scmp.lt.s32.totalorder %s28, 1
        %s1159 = scalar_select %p1158, %s28, 1
        %p1160 = scmp.lt.s32.totalorder %s29, 1
        %s1161 = scalar_select %p1160, %s29, 1
        %s1162 = smul.addr %s1159, 2
        %s1163 = sadd.s32 %s1161, %s1162
        %s1164 = smul.addr %s1163, 8
        %s1165 = scalar_lea.vmem %s5, %s1164
        %p1166 = scmp.lt.s32.totalorder %s28, 1
        %s1167 = scalar_select %p1166, %s28, 1
        %p1168 = scmp.lt.s32.totalorder %s29, 1
        %s1169 = scalar_select %p1168, %s29, 1
        %s1170 = smul.addr %s1167, 2
        %s1171 = sadd.s32 %s1169, %s1170
        %s1172 = smul.addr %s1171, 8
        %s1173 = scalar_lea.vmem %s6, %s1172
        // Predicated region
        $region41: #{tpu_custom_call.1} parent=35 // pred_check
          %p1174 = pneg %p152
        $region42: #{tpu_custom_call.1} parent=35 // pred_check_branch
          %1176 = sbr.rel (%p1174) target = $region44
        $region43: #{tpu_custom_call.1} parent=35 // pred_region
          %s1178 = ssub.s32 128, 128
          %1179 = vsyncadd %s1154, %s1178
          %s1180 = smul.addr %s28, 2
          %s1181 = sadd.s32 %s29, %s1180
          %s1182 = smul.addr %s1181, 128
          %s1183 = scalar_lea.hbm %s4, %s1182
          %s1185 = sshll.u32 %s1157, 4
          %s1186 = int_to_ptr.vmem [resolvable:$true] %s1185
          %1188 = dma.vmem_to_hbm [thread:$0]  %s1186, 128, %s1183, %s1154
        $region44: #{tpu_custom_call.1} parent=35 // pred_fallthru
          _
        // Predicated region
        $region45: #{tpu_custom_call.1} parent=35 // pred_check
          %p1189 = pneg %p180
        $region46: #{tpu_custom_call.1} parent=35 // pred_check_branch
          %1191 = sbr.rel (%p1189) target = $region48
        $region47: #{tpu_custom_call.1} parent=35 // pred_region
          _
        $region48: #{tpu_custom_call.1} parent=35 // pred_fallthru
          _
        // Predicated region
        $region49: #{tpu_custom_call.1} parent=35 // pred_check
          %p1192 = pneg %p208
        $region50: #{tpu_custom_call.1} parent=35 // pred_check_branch
          %1194 = sbr.rel (%p1192) target = $region52
        $region51: #{tpu_custom_call.1} parent=35 // pred_region
          _
        $region52: #{tpu_custom_call.1} parent=35 // pred_fallthru
          _
      $region36: #{tpu_custom_call.1} parent=5 // pred_fallthru
        _
      %p1195 = scmp.le.s32.totalorder 2, %s19
      // Predicated region
      $region53: #{tpu_custom_call.1} parent=5 // pred_check
        %p1196 = pneg %p1195
      $region54: #{tpu_custom_call.1} parent=5 // pred_check_branch
        %1198 = sbr.rel (%p1196) target = $region56
      $region55: #{tpu_custom_call.1} parent=5 // pred_region
        %s1199 = ssub.s32 %s19, 2
        // Predicated region
        $region57: #{tpu_custom_call.1} parent=55 // pred_check
          %p1200 = pneg %p158
        $region58: #{tpu_custom_call.1} parent=55 // pred_check_branch
          %1202 = sbr.rel (%p1200) target = $region60
        $region59: #{tpu_custom_call.1} parent=55 // pred_region
          %s1203 = sand.u32 %s143, 1
          %s1204 = scalar_lea.sflag [#allocation4], %s1203
          %s1205 = sand.u32 %s143, 1
          %s1206 = smul.addr %s1205, 8
          %s1207 = scalar_lea.vmem [#allocation5], %s1206
          %1208 = dma.done %s1204, 128
        $region60: #{tpu_custom_call.1} parent=55 // pred_fallthru
          _
        // Predicated region
        $region61: #{tpu_custom_call.1} parent=55 // pred_check
          %p1209 = pneg %p186
        $region62: #{tpu_custom_call.1} parent=55 // pred_check_branch
          %1211 = sbr.rel (%p1209) target = $region64
        $region63: #{tpu_custom_call.1} parent=55 // pred_region
          %p1212 = scmp.lt.s32.totalorder %s30, 1
          %s1213 = scalar_select %p1212, %s30, 1
          %p1214 = scmp.lt.s32.totalorder %s31, 1
          %s1215 = scalar_select %p1214, %s31, 1
          %s1216 = smul.addr %s1213, 2
          %s1217 = sadd.s32 %s1215, %s1216
          %s1218 = smul.addr %s1217, 8
          %s1219 = scalar_lea.vmem %s5, %s1218
        $region64: #{tpu_custom_call.1} parent=55 // pred_fallthru
          _
        // Predicated region
        $region65: #{tpu_custom_call.1} parent=55 // pred_check
          %p1220 = pneg %p214
        $region66: #{tpu_custom_call.1} parent=55 // pred_check_branch
          %1222 = sbr.rel (%p1220) target = $region68
        $region67: #{tpu_custom_call.1} parent=55 // pred_region
          %p1223 = scmp.lt.s32.totalorder %s30, 1
          %s1224 = scalar_select %p1223, %s30, 1
          %p1225 = scmp.lt.s32.totalorder %s31, 1
          %s1226 = scalar_select %p1225, %s31, 1
          %s1227 = smul.addr %s1224, 2
          %s1228 = sadd.s32 %s1226, %s1227
          %s1229 = smul.addr %s1228, 8
          %s1230 = scalar_lea.vmem %s6, %s1229
        $region68: #{tpu_custom_call.1} parent=55 // pred_fallthru
          _
      $region56: #{tpu_custom_call.1} parent=5 // pred_fallthru
        _
    $region6: #{tpu_custom_call.1} parent=1 // loop_footer
      %s23 = sadd.s32 1, %s19
    $region7: #{tpu_custom_call.1} parent=1 // loop_footer_branch
      %18 = sbr.rel target = $region3
    $region8: #{tpu_custom_call.1} parent=1 // loop_exit
      _
    %1231 = vsyncpa [#allocation3], 1
    %s1232 = scalar_lea.sflag [#allocation3], 1
    %1233 = vsyncpa %s1232, 1
    %1234 = vsyncpa [#allocation4], 1
    %s1235 = scalar_lea.sflag [#allocation4], 1
    %1236 = vsyncpa %s1235, 1

</llo_original>
